<compile_context>
chip_gen: v5e
topology: v5e:2x2
jax: 0.10.0
libtpu: 0.0.40
codegen_flags: <defaults>
</compile_context>

<pallas_src>
import functools
import math

import jax
import jax.numpy as jnp
from jax import lax
from jax.experimental import pallas as pl
from jax.experimental.pallas import tpu as pltpu

LN_EPS = 1e-5                     # nn.LayerNorm default eps
INV_SQRT2 = 1.0 / math.sqrt(2.0)


def _round_up(n: int, m: int) -> int:
    return ((n + m - 1) // m) * m


def _regression_head_kernel(x_ref, w1_ref, b1_ref, w2_ref, b2_ref, o_ref, *, inv_h):
    # x: [TB, E]; w1: [E, H_p]; b1: [1, H_p]; w2: [H_p, O_p] (gamma folded);
    # b2: [1, O_p] (beta@w2 + b2 folded); o: [TB, O_p]
    #
    # Matmul operands in the weight dtype (bf16 by default = native MXU rate),
    # f32 accumulation via preferred_element_type.
    x = x_ref[...].astype(w1_ref.dtype)
    h = jnp.dot(x, w1_ref[...], preferred_element_type=jnp.float32) + b1_ref[...]

    # Exact (erf) GELU — matches nn.GELU() default.  GELU(0) == 0, so zero-padded
    # hidden lanes stay exactly 0 and do not perturb the LayerNorm statistics.
    h = 0.5 * h * (1.0 + lax.erf(h * INV_SQRT2))

    # One-pass LayerNorm statistics over the true hidden width H (inv_h = 1/H,
    # static).  Padded lanes contribute 0 to both sums; rsqrt runs on the EUP.
    s1 = jnp.sum(h, axis=-1, keepdims=True)
    s2 = jnp.sum(h * h, axis=-1, keepdims=True)
    mean = s1 * inv_h
    var = s2 * inv_h - mean * mean
    ln = (h - mean) * lax.rsqrt(var + LN_EPS)      # gamma/beta already folded into w2/b2

    # Linear 2: padded hidden rows of w2 are 0, so padded lanes of `ln` are inert.
    out = jnp.dot(ln.astype(w2_ref.dtype), w2_ref[...],
                  preferred_element_type=jnp.float32) + b2_ref[...]
    o_ref[...] = out.astype(o_ref.dtype)


def regression_head(x, w1, b1, gamma, beta, w2, b2, *, block_b=512, use_bf16=True):
    """x: [B, E] float32 -> [B, O] float32.

    w1: [E, H], b1: [1, H], gamma/beta: [1, H], w2: [H, O], b2: [1, O].
    """
    B, E = x.shape
    H = w1.shape[1]
    O = w2.shape[1]

    # ---- Fold the LayerNorm affine into Linear-2 (one-time, tiny):
    #   (ln*gamma + beta) @ w2 + b2 == ln @ (gamma[:,None]*w2) + (beta @ w2 + b2)
    w2_f = gamma.reshape(H, 1) * w2
    b2_f = beta.reshape(1, H) @ w2 + b2

    # ---- Lane-pad only the small weight dims (H, O -> multiples of 128); x itself
    # is never padded or copied.  Padded hidden lanes are exactly 0 after GELU and
    # the matching w2 rows are 0, so both LN stats and the output stay exact.
    H_p = _round_up(H, 128)
    O_p = _round_up(O, 128)

    def pad2(a, rows, cols):
        return jnp.pad(a, ((0, rows - a.shape[0]), (0, cols - a.shape[1])))

    wt_dtype = jnp.bfloat16 if use_bf16 else x.dtype
    w1_p = pad2(w1, E, H_p).astype(wt_dtype)
    b1_p = pad2(b1.reshape(1, H), 1, H_p)              # biases stay f32
    w2_p = pad2(w2_f, H_p, O_p).astype(wt_dtype)
    b2_p = pad2(b2_f.reshape(1, O), 1, O_p)

    # ---- Batch tile: sublane aligned (16 rows when bf16 is in play), and at least
    # 2 grid steps whenever B permits so v7x's two TensorCores both get work.
    sub = 16 if use_bf16 else 8
    if B <= sub:
        TB = B                                          # full-dim block: exempt from the 8-rule
    else:
        TB = max(sub, min(block_b, _round_up(pl.cdiv(B, 2), sub)))
    grid_b = pl.cdiv(B, TB)                             # ragged tail handled by the masked last block

    # TODO(synk): for very large E*H (f32 w1 approaching ~16 MiB+, i.e. beyond v7x's
    # 64 MiB VMEM budget once activations are added), add a K-tiled grid axis over E
    # ("arbitrary", last) with a VMEM f32 accumulator and run GELU->LN->matmul2 in a
    # pl.when epilogue on the final k step.

    kernel = functools.partial(_regression_head_kernel, inv_h=1.0 / H)
    args = (x, w1_p, b1_p, w2_p, b2_p)

    def _build_call(single_buffer_weights: bool):
        if single_buffer_weights:
            # Constant index_map -> double buffering buys nothing; single-buffer to
            # halve the resident-weight VMEM footprint.
            def wspec(shape):
                return pl.BlockSpec(shape, lambda i: (0, 0), pipeline_mode=pl.Buffered(1))
            w_copies = 1
        else:
            def wspec(shape):
                return pl.BlockSpec(shape, lambda i: (0, 0))
            w_copies = 2

        wt_bytes = 2 if use_bf16 else 4
        vmem_bytes = int(min(
            w_copies * ((E * H_p + H_p * O_p) * wt_bytes + (H_p + O_p) * 4)  # resident weights
            + 2 * TB * (E + O_p) * 4      # double-buffered x / out tiles (f32)
            + 8 * TB * H_p * 4            # h / ln intermediates + compiler temporaries
            + (8 << 20),                  # headroom
            64 << 20))                    # never exceed v7x physical VMEM

        return pl.pallas_call(
            kernel,
            out_shape=jax.ShapeDtypeStruct((B, O_p), jnp.float32),
            grid=(grid_b,),
            in_specs=[
                pl.BlockSpec((TB, E), lambda i: (i, 0)),   # x: batch-tiled, natural E (no pad round-trip)
                wspec((E, H_p)),                           # w1: resident
                wspec((1, H_p)),                           # b1: resident
                wspec((H_p, O_p)),                         # w2 (gamma folded): resident
                wspec((1, O_p)),                           # b2 (beta folded): resident
            ],
            out_specs=pl.BlockSpec((TB, O_p), lambda i: (i, 0)),
            compiler_params=pltpu.CompilerParams(
                dimension_semantics=("parallel",),         # shard batch across TCs on v7x
                vmem_limit_bytes=vmem_bytes,
            ),
        )

    try:
        out = _build_call(True)(*args)
    except Exception:
        # pipeline_mode=pl.Buffered(1) not accepted by this JAX/Mosaic build;
        # fall back to default double-buffered resident weights (correctness identical).
        out = _build_call(False)(*args)

    return out[:, :O].astype(x.dtype)


def regression_head_ref(x, w1, b1, gamma, beta, w2, b2):
    """Pure-JAX reference matching the PyTorch module."""
    h = x @ w1 + b1
    h = 0.5 * h * (1.0 + lax.erf(h * INV_SQRT2))
    mean = jnp.mean(h, axis=-1, keepdims=True)
    var = jnp.mean((h - mean) ** 2, axis=-1, keepdims=True)
    ln = (h - mean) * lax.rsqrt(var + LN_EPS) * gamma + beta
    return ln @ w2 + b2


def init_params(key, embedding_dim, hidden_dim, output_dim):
    """Deterministic init mimicking nn.Linear (uniform +-1/sqrt(fan_in)) and nn.LayerNorm (ones/zeros)."""
    k1, k2, k3, k4 = jax.random.split(key, 4)
    lim1 = 1.0 / math.sqrt(embedding_dim)
    lim2 = 1.0 / math.sqrt(hidden_dim)
    w1 = jax.random.uniform(k1, (embedding_dim, hidden_dim), jnp.float32, -lim1, lim1)
    b1 = jax.random.uniform(k2, (1, hidden_dim), jnp.float32, -lim1, lim1)
    gamma = jnp.ones((1, hidden_dim), jnp.float32)
    beta = jnp.zeros((1, hidden_dim), jnp.float32)
    w2 = jax.random.uniform(k3, (hidden_dim, output_dim), jnp.float32, -lim2, lim2)
    b2 = jax.random.uniform(k4, (1, output_dim), jnp.float32, -lim2, lim2)
    return w1, b1, gamma, beta, w2, b2


if __name__ == "__main__":
    embedding_dim = 32
    hidden_dim = 64
    output_dim = 8
    batch = 8

    key = jax.random.PRNGKey(0)
    kx, kp = jax.random.split(key)
    x = jax.random.normal(kx, (batch, embedding_dim), jnp.float32)
    params = init_params(kp, embedding_dim, hidden_dim, output_dim)

    ref = regression_head_ref(x, *params)

    # Performance-default path: bf16 matmul operands, f32 accumulation/elementwise.
    out = regression_head(x, *params)
    jax.block_until_ready(out)
    assert out.shape == (batch, output_dim) and out.dtype == jnp.float32
    assert jnp.allclose(out, ref, rtol=3e-2, atol=3e-2), float(jnp.max(jnp.abs(out - ref)))

    # f32 numerics path (matches the original module's float32 math closely).
    out_f32 = regression_head(x, *params, use_bf16=False)
    jax.block_until_ready(out_f32)
    assert jnp.allclose(out_f32, ref, rtol=1e-4, atol=1e-4), float(jnp.max(jnp.abs(out_f32 - ref)))

    print("KERNEL_OK")
</pallas_src>

<mosaic_0001>
module attributes {stable_mosaic.version = 11 : i64} {
  func.func @_regression_head_kernel(%arg0: i32, %arg1: memref<8x32xf32, #tpu.memory_space<vmem>>, %arg2: memref<32x128xbf16, #tpu.memory_space<vmem>>, %arg3: memref<1x128xf32, #tpu.memory_space<vmem>>, %arg4: memref<128x128xbf16, #tpu.memory_space<vmem>>, %arg5: memref<1x128xf32, #tpu.memory_space<vmem>>, %arg6: memref<8x128xf32, #tpu.memory_space<vmem>>) attributes {dimension_semantics = [#tpu.dimension_semantics<parallel>], iteration_bounds = array<i64: 1>, scalar_prefetch = 0 : i64, scratch_operands = 0 : i64, tpu.core_type = #tpu.core_type<tc>, window_params = [{transform_indices = @transform_0, window_bounds = array<i64: 8, 32>}, {pipeline_mode = #tpu.pipeline_mode<synchronous>, transform_indices = @transform_1, window_bounds = array<i64: 32, 128>}, {pipeline_mode = #tpu.pipeline_mode<synchronous>, transform_indices = @transform_2, window_bounds = array<i64: 1, 128>}, {pipeline_mode = #tpu.pipeline_mode<synchronous>, transform_indices = @transform_3, window_bounds = array<i64: 128, 128>}, {pipeline_mode = #tpu.pipeline_mode<synchronous>, transform_indices = @transform_4, window_bounds = array<i64: 1, 128>}, {transform_indices = @transform_5, window_bounds = array<i64: 8, 128>}]} {
    %c0 = arith.constant 0 : index
    %c0_0 = arith.constant 0 : index
    %0 = vector.load %arg1[%c0, %c0_0] : memref<8x32xf32, #tpu.memory_space<vmem>>, vector<8x32xf32>
    %1 = arith.truncf %0 : vector<8x32xf32> to vector<8x32xbf16>
    %c0_1 = arith.constant 0 : index
    %c0_2 = arith.constant 0 : index
    %2 = vector.load %arg2[%c0_1, %c0_2] : memref<32x128xbf16, #tpu.memory_space<vmem>>, vector<32x128xbf16>
    %cst = arith.constant dense<0.000000e+00> : vector<8x128xf32>
    %3 = tpu.matmul %1, %2, %cst {dimension_numbers = #tpu.dot_dimension_numbers<[1], [0], [0], [1], [0, 0, 1, 1], [], []>} : vector<8x32xbf16>, vector<32x128xbf16>, vector<8x128xf32> -> vector<8x128xf32>
    %c0_3 = arith.constant 0 : index
    %c0_4 = arith.constant 0 : index
    %4 = vector.load %arg3[%c0_3, %c0_4] : memref<1x128xf32, #tpu.memory_space<vmem>>, vector<1x128xf32>
    %5 = vector.broadcast %4 : vector<1x128xf32> to vector<8x128xf32>
    %6 = arith.addf %3, %5 : vector<8x128xf32>
    %cst_5 = arith.constant 5.000000e-01 : f32
    %7 = vector.broadcast %cst_5 : f32 to vector<8x128xf32>
    %8 = arith.mulf %7, %6 : vector<8x128xf32>
    %cst_6 = arith.constant 0.707106769 : f32
    %9 = vector.broadcast %cst_6 : f32 to vector<8x128xf32>
    %10 = arith.mulf %6, %9 : vector<8x128xf32>
    %11 = math.erf %10 : vector<8x128xf32>
    %cst_7 = arith.constant 1.000000e+00 : f32
    %12 = vector.broadcast %cst_7 : f32 to vector<8x128xf32>
    %13 = arith.addf %12, %11 : vector<8x128xf32>
    %14 = arith.mulf %8, %13 : vector<8x128xf32>
    %cst_8 = arith.constant dense<0.000000e+00> : vector<8xf32>
    %15 = vector.multi_reduction <add>, %14, %cst_8 [1] : vector<8x128xf32> to vector<8xf32>
    %16 = vector.shape_cast %15 : vector<8xf32> to vector<8x1xf32>
    %17 = arith.mulf %14, %14 : vector<8x128xf32>
    %cst_9 = arith.constant dense<0.000000e+00> : vector<8xf32>
    %18 = vector.multi_reduction <add>, %17, %cst_9 [1] : vector<8x128xf32> to vector<8xf32>
    %19 = vector.shape_cast %18 : vector<8xf32> to vector<8x1xf32>
    %cst_10 = arith.constant 1.562500e-02 : f32
    %20 = vector.broadcast %cst_10 : f32 to vector<8x1xf32>
    %21 = arith.mulf %16, %20 : vector<8x1xf32>
    %cst_11 = arith.constant 1.562500e-02 : f32
    %22 = vector.broadcast %cst_11 : f32 to vector<8x1xf32>
    %23 = arith.mulf %19, %22 : vector<8x1xf32>
    %24 = arith.mulf %21, %21 : vector<8x1xf32>
    %25 = arith.subf %23, %24 : vector<8x1xf32>
    %26 = vector.broadcast %21 : vector<8x1xf32> to vector<8x128xf32>
    %27 = arith.subf %14, %26 : vector<8x128xf32>
    %cst_12 = arith.constant 9.99999974E-6 : f32
    %28 = vector.broadcast %cst_12 : f32 to vector<8x1xf32>
    %29 = arith.addf %25, %28 : vector<8x1xf32>
    %30 = math.rsqrt %29 : vector<8x1xf32>
    %31 = vector.broadcast %30 : vector<8x1xf32> to vector<8x128xf32>
    %32 = arith.mulf %27, %31 : vector<8x128xf32>
    %33 = arith.truncf %32 : vector<8x128xf32> to vector<8x128xbf16>
    %c0_13 = arith.constant 0 : index
    %c0_14 = arith.constant 0 : index
    %34 = vector.load %arg4[%c0_13, %c0_14] : memref<128x128xbf16, #tpu.memory_space<vmem>>, vector<128x128xbf16>
    %cst_15 = arith.constant dense<0.000000e+00> : vector<8x128xf32>
    %35 = tpu.matmul %33, %34, %cst_15 {dimension_numbers = #tpu.dot_dimension_numbers<[1], [0], [0], [1], [0, 0, 1, 1], [], []>} : vector<8x128xbf16>, vector<128x128xbf16>, vector<8x128xf32> -> vector<8x128xf32>
    %c0_16 = arith.constant 0 : index
    %c0_17 = arith.constant 0 : index
    %36 = vector.load %arg5[%c0_16, %c0_17] : memref<1x128xf32, #tpu.memory_space<vmem>>, vector<1x128xf32>
    %37 = vector.broadcast %36 : vector<1x128xf32> to vector<8x128xf32>
    %38 = arith.addf %35, %37 : vector<8x128xf32>
    %c0_18 = arith.constant 0 : index
    %c0_19 = arith.constant 0 : index
    %39 = vector.load %arg6[%c0_18, %c0_19] : memref<8x128xf32, #tpu.memory_space<vmem>>, vector<8x128xf32>
    tpu.vector_store %arg6[%c0_18, %c0_19], %38 {strides = array<i32>} : memref<8x128xf32, #tpu.memory_space<vmem>>, vector<8x128xf32>,
    return
  }
  func.func @transform_0(%arg0: i32) -> (i32, i32) {
    %c0_i32 = arith.constant 0 : i32
    %c0_i32_0 = arith.constant 0 : i32
    return %arg0, %c0_i32 : i32, i32
  }
  func.func @transform_1(%arg0: i32) -> (i32, i32) {
    %c0_i32 = arith.constant 0 : i32
    %c0_i32_0 = arith.constant 0 : i32
    %c0_i32_1 = arith.constant 0 : i32
    return %c0_i32, %c0_i32_0 : i32, i32
  }
  func.func @transform_2(%arg0: i32) -> (i32, i32) {
    %c0_i32 = arith.constant 0 : i32
    %c0_i32_0 = arith.constant 0 : i32
    %c0_i32_1 = arith.constant 0 : i32
    return %c0_i32, %c0_i32_0 : i32, i32
  }
  func.func @transform_3(%arg0: i32) -> (i32, i32) {
    %c0_i32 = arith.constant 0 : i32
    %c0_i32_0 = arith.constant 0 : i32
    %c0_i32_1 = arith.constant 0 : i32
    return %c0_i32, %c0_i32_0 : i32, i32
  }
  func.func @transform_4(%arg0: i32) -> (i32, i32) {
    %c0_i32 = arith.constant 0 : i32
    %c0_i32_0 = arith.constant 0 : i32
    %c0_i32_1 = arith.constant 0 : i32
    return %c0_i32, %c0_i32_0 : i32, i32
  }
  func.func @transform_5(%arg0: i32) -> (i32, i32) {
    %c0_i32 = arith.constant 0 : i32
    %c0_i32_0 = arith.constant 0 : i32
    return %arg0, %c0_i32 : i32, i32
  }
}

module attributes {stable_mosaic.version = 11 : i64} {
  func.func @_regression_head_kernel(%arg0: i32, %arg1: memref<8x32xf32, #tpu.memory_space<vmem>>, %arg2: memref<32x128xbf16, #tpu.memory_space<vmem>>, %arg3: memref<1x128xf32, #tpu.memory_space<vmem>>, %arg4: memref<128x128xbf16, #tpu.memory_space<vmem>>, %arg5: memref<1x128xf32, #tpu.memory_space<vmem>>, %arg6: memref<8x128xf32, #tpu.memory_space<vmem>>) attributes {dimension_semantics = [#tpu.dimension_semantics<parallel>], iteration_bounds = array<i64: 1>, scalar_prefetch = 0 : i64, scratch_operands = 0 : i64, tpu.core_type = #tpu.core_type<tc>, window_params = [{transform_indices = @transform_0, window_bounds = array<i64: 8, 32>}, {pipeline_mode = #tpu.pipeline_mode<synchronous>, transform_indices = @transform_1, window_bounds = array<i64: 32, 128>}, {pipeline_mode = #tpu.pipeline_mode<synchronous>, transform_indices = @transform_2, window_bounds = array<i64: 1, 128>}, {pipeline_mode = #tpu.pipeline_mode<synchronous>, transform_indices = @transform_3, window_bounds = array<i64: 128, 128>}, {pipeline_mode = #tpu.pipeline_mode<synchronous>, transform_indices = @transform_4, window_bounds = array<i64: 1, 128>}, {transform_indices = @transform_5, window_bounds = array<i64: 8, 128>}]} {
    %c0 = arith.constant 0 : index
    %c0_0 = arith.constant 0 : index
    %0 = vector.load %arg1[%c0, %c0_0] : memref<8x32xf32, #tpu.memory_space<vmem>>, vector<8x32xf32>
    %1 = arith.truncf %0 : vector<8x32xf32> to vector<8x32xbf16>
    %c0_1 = arith.constant 0 : index
    %c0_2 = arith.constant 0 : index
    %2 = vector.load %arg2[%c0_1, %c0_2] : memref<32x128xbf16, #tpu.memory_space<vmem>>, vector<32x128xbf16>
    %cst = arith.constant dense<0.000000e+00> : vector<8x128xf32>
    %3 = tpu.matmul %1, %2, %cst {dimension_numbers = #tpu.dot_dimension_numbers<[1], [0], [0], [1], [0, 0, 1, 1], [], []>} : vector<8x32xbf16>, vector<32x128xbf16>, vector<8x128xf32> -> vector<8x128xf32>
    %c0_3 = arith.constant 0 : index
    %c0_4 = arith.constant 0 : index
    %4 = vector.load %arg3[%c0_3, %c0_4] : memref<1x128xf32, #tpu.memory_space<vmem>>, vector<1x128xf32>
    %5 = vector.broadcast %4 : vector<1x128xf32> to vector<8x128xf32>
    %6 = arith.addf %3, %5 : vector<8x128xf32>
    %cst_5 = arith.constant 5.000000e-01 : f32
    %7 = vector.broadcast %cst_5 : f32 to vector<8x128xf32>
    %8 = arith.mulf %7, %6 : vector<8x128xf32>
    %cst_6 = arith.constant 0.707106769 : f32
    %9 = vector.broadcast %cst_6 : f32 to vector<8x128xf32>
    %10 = arith.mulf %6, %9 : vector<8x128xf32>
    %11 = math.erf %10 : vector<8x128xf32>
    %cst_7 = arith.constant 1.000000e+00 : f32
    %12 = vector.broadcast %cst_7 : f32 to vector<8x128xf32>
    %13 = arith.addf %12, %11 : vector<8x128xf32>
    %14 = arith.mulf %8, %13 : vector<8x128xf32>
    %cst_8 = arith.constant dense<0.000000e+00> : vector<8xf32>
    %15 = vector.multi_reduction <add>, %14, %cst_8 [1] : vector<8x128xf32> to vector<8xf32>
    %16 = vector.shape_cast %15 : vector<8xf32> to vector<8x1xf32>
    %17 = arith.mulf %14, %14 : vector<8x128xf32>
    %cst_9 = arith.constant dense<0.000000e+00> : vector<8xf32>
    %18 = vector.multi_reduction <add>, %17, %cst_9 [1] : vector<8x128xf32> to vector<8xf32>
    %19 = vector.shape_cast %18 : vector<8xf32> to vector<8x1xf32>
    %cst_10 = arith.constant 1.562500e-02 : f32
    %20 = vector.broadcast %cst_10 : f32 to vector<8x1xf32>
    %21 = arith.mulf %16, %20 : vector<8x1xf32>
    %cst_11 = arith.constant 1.562500e-02 : f32
    %22 = vector.broadcast %cst_11 : f32 to vector<8x1xf32>
    %23 = arith.mulf %19, %22 : vector<8x1xf32>
    %24 = arith.mulf %21, %21 : vector<8x1xf32>
    %25 = arith.subf %23, %24 : vector<8x1xf32>
    %26 = vector.broadcast %21 : vector<8x1xf32> to vector<8x128xf32>
    %27 = arith.subf %14, %26 : vector<8x128xf32>
    %cst_12 = arith.constant 9.99999974E-6 : f32
    %28 = vector.broadcast %cst_12 : f32 to vector<8x1xf32>
    %29 = arith.addf %25, %28 : vector<8x1xf32>
    %30 = math.rsqrt %29 : vector<8x1xf32>
    %31 = vector.broadcast %30 : vector<8x1xf32> to vector<8x128xf32>
    %32 = arith.mulf %27, %31 : vector<8x128xf32>
    %33 = arith.truncf %32 : vector<8x128xf32> to vector<8x128xbf16>
    %c0_13 = arith.constant 0 : index
    %c0_14 = arith.constant 0 : index
    %34 = vector.load %arg4[%c0_13, %c0_14] : memref<128x128xbf16, #tpu.memory_space<vmem>>, vector<128x128xbf16>
    %cst_15 = arith.constant dense<0.000000e+00> : vector<8x128xf32>
    %35 = tpu.matmul %33, %34, %cst_15 {dimension_numbers = #tpu.dot_dimension_numbers<[1], [0], [0], [1], [0, 0, 1, 1], [], []>} : vector<8x128xbf16>, vector<128x128xbf16>, vector<8x128xf32> -> vector<8x128xf32>
    %c0_16 = arith.constant 0 : index
    %c0_17 = arith.constant 0 : index
    %36 = vector.load %arg5[%c0_16, %c0_17] : memref<1x128xf32, #tpu.memory_space<vmem>>, vector<1x128xf32>
    %37 = vector.broadcast %36 : vector<1x128xf32> to vector<8x128xf32>
    %38 = arith.addf %35, %37 : vector<8x128xf32>
    %c0_18 = arith.constant 0 : index
    %c0_19 = arith.constant 0 : index
    %39 = vector.load %arg6[%c0_18, %c0_19] : memref<8x128xf32, #tpu.memory_space<vmem>>, vector<8x128xf32>
    tpu.vector_store %arg6[%c0_18, %c0_19], %38 {strides = array<i32>} : memref<8x128xf32, #tpu.memory_space<vmem>>, vector<8x128xf32>,
    return
  }
  func.func @transform_0(%arg0: i32) -> (i32, i32) {
    %c0_i32 = arith.constant 0 : i32
    %c0_i32_0 = arith.constant 0 : i32
    return %arg0, %c0_i32 : i32, i32
  }
  func.func @transform_1(%arg0: i32) -> (i32, i32) {
    %c0_i32 = arith.constant 0 : i32
    %c0_i32_0 = arith.constant 0 : i32
    %c0_i32_1 = arith.constant 0 : i32
    return %c0_i32, %c0_i32_0 : i32, i32
  }
  func.func @transform_2(%arg0: i32) -> (i32, i32) {
    %c0_i32 = arith.constant 0 : i32
    %c0_i32_0 = arith.constant 0 : i32
    %c0_i32_1 = arith.constant 0 : i32
    return %c0_i32, %c0_i32_0 : i32, i32
  }
  func.func @transform_3(%arg0: i32) -> (i32, i32) {
    %c0_i32 = arith.constant 0 : i32
    %c0_i32_0 = arith.constant 0 : i32
    %c0_i32_1 = arith.constant 0 : i32
    return %c0_i32, %c0_i32_0 : i32, i32
  }
  func.func @transform_4(%arg0: i32) -> (i32, i32) {
    %c0_i32 = arith.constant 0 : i32
    %c0_i32_0 = arith.constant 0 : i32
    %c0_i32_1 = arith.constant 0 : i32
    return %c0_i32, %c0_i32_0 : i32, i32
  }
  func.func @transform_5(%arg0: i32) -> (i32, i32) {
    %c0_i32 = arith.constant 0 : i32
    %c0_i32_0 = arith.constant 0 : i32
    return %arg0, %c0_i32 : i32, i32
  }
}

</mosaic_0001>

<llo_original>
// kernel: tpu_custom_call.1
$region0: #{tpu_custom_call.1}
  #allocation0 [shape = 'u32[]', space=smem, size = 0x4, offset = 0x4, fixed_abs, tag = 'smem constant byte address 0x4 - core index']
  #allocation1 [shape = 'u32[72,128]{1,0:T(1,128)}', space=vmem, size = 0x9000, scoped, tag = 'internal scratch']
  %s0 = inlined_call_operand.hbm [shape: f32[8,32], index: 0, kind: input, shape index: {}]
  %s1 = inlined_call_operand.hbm [shape: bf16[32,128], index: 1, kind: input, shape index: {}]
  %s2 = inlined_call_operand.vmem [shape: f32[1,128], index: 2, kind: input, shape index: {}]
  %s3 = inlined_call_operand.hbm [shape: bf16[128,128], index: 3, kind: input, shape index: {}]
  %s4 = inlined_call_operand.vmem [shape: f32[1,128], index: 4, kind: input, shape index: {}]
  %s5 = inlined_call_operand.hbm [shape: f32[8,128], index: 5, kind: output, shape index: {}]
  %s6 = sld [smem:[#allocation0]]
  $region42: #{tpu_custom_call.1} parent=0
    _
  %s8 = ssub.s32 1, %s6
  %s9 = scalar_select 0, %s8, %s6
  $region1: #{tpu_custom_call.1} parent=0
    #allocation2 [shape = 'u8[4096]{0}', space=vmem, size = 0x1000, scoped, tag = 'input window, operand 0, single buffered']
    #allocation3 [shape = 's32[1]{0}', space=sflag, size = 0x4, scoped, tag = 'scoped memory for tpu_custom_call.1']
    #allocation4 [shape = 's32[1]{0}', space=sflag, size = 0x4, scoped, tag = 'scoped memory for tpu_custom_call.1']
    #allocation5 [shape = 'u8[8192]{0}', space=vmem, size = 0x2000, scoped, tag = 'input window, operand 1, single buffered']
    #allocation6 [shape = 's32[1]{0}', space=sflag, size = 0x4, scoped, tag = 'scoped memory for tpu_custom_call.1']
    #allocation7 [shape = 'u8[32768]{0}', space=vmem, size = 0x8000, scoped, tag = 'input window, operand 3, single buffered']
    #allocation8 [shape = 'u8[4096]{0}', space=vmem, size = 0x1000, scoped, tag = 'output window, operand 0, single buffered']
    %10 = vsyncpa [#allocation3], 0
    %11 = vsyncpa [#allocation6], 0
    %12 = vsyncpa [#allocation4], 0
    // Predicated region
    $region2: #{tpu_custom_call.1} parent=1 // pred_check
      _
    $region3: #{tpu_custom_call.1} parent=1 // pred_check_branch
      %14 = sbr.rel (0) target = $region5
    $region4: #{tpu_custom_call.1} parent=1 // pred_region
      %16 = vsyncadd [#allocation3], 0
      %s18 = sshll.u32 %s0, 4
      %s19 = int_to_ptr.hbm [resolvable:$true] %s18
      %s20 = sshll.u32 [#allocation2], 4
      %s21 = int_to_ptr.vmem [resolvable:$true] %s20
      %23 = dma.hbm_to_vmem [thread:$0]  %s19, 128, %s21, [#allocation3]
    $region5: #{tpu_custom_call.1} parent=1 // pred_fallthru
      _
    // Predicated region
    $region6: #{tpu_custom_call.1} parent=1 // pred_check
      _
    $region7: #{tpu_custom_call.1} parent=1 // pred_check_branch
      %25 = sbr.rel (0) target = $region9
    $region8: #{tpu_custom_call.1} parent=1 // pred_region
      %27 = vsyncadd [#allocation6], 0
      %s28 = sshll.u32 %s1, 4
      %s29 = int_to_ptr.hbm [resolvable:$true] %s28
      %s30 = sshll.u32 [#allocation5], 4
      %s31 = int_to_ptr.vmem [resolvable:$true] %s30
      %36 = dma.hbm_to_vmem [thread:$0]  %s29, 256, %s31, [#allocation6], 64, 64, 4
    $region9: #{tpu_custom_call.1} parent=1 // pred_fallthru
      _
    // Predicated region
    $region10: #{tpu_custom_call.1} parent=1 // pred_check
      _
    $region11: #{tpu_custom_call.1} parent=1 // pred_check_branch
      %38 = sbr.rel (0) target = $region13
    $region12: #{tpu_custom_call.1} parent=1 // pred_region
      _
    $region13: #{tpu_custom_call.1} parent=1 // pred_fallthru
      _
    // Predicated region
    $region14: #{tpu_custom_call.1} parent=1 // pred_check
      _
    $region15: #{tpu_custom_call.1} parent=1 // pred_check_branch
      %40 = sbr.rel (0) target = $region17
    $region16: #{tpu_custom_call.1} parent=1 // pred_region
      %42 = vsyncadd [#allocation6], 0
      %s43 = sshll.u32 %s3, 4
      %s44 = int_to_ptr.hbm [resolvable:$true] %s43
      %s45 = sshll.u32 [#allocation7], 4
      %s46 = int_to_ptr.vmem [resolvable:$true] %s45
      %51 = dma.hbm_to_vmem [thread:$0]  %s44, 1024, %s46, [#allocation6], 64, 64, 4
    $region17: #{tpu_custom_call.1} parent=1 // pred_fallthru
      _
    // Predicated region
    $region18: #{tpu_custom_call.1} parent=1 // pred_check
      _
    $region19: #{tpu_custom_call.1} parent=1 // pred_check_branch
      %53 = sbr.rel (0) target = $region21
    $region20: #{tpu_custom_call.1} parent=1 // pred_region
      _
    $region21: #{tpu_custom_call.1} parent=1 // pred_fallthru
      _
    // Predicated region
    $region22: #{tpu_custom_call.1} parent=1 // pred_check
      _
    $region23: #{tpu_custom_call.1} parent=1 // pred_check_branch
      %55 = sbr.rel (0) target = $region25
    $region24: #{tpu_custom_call.1} parent=1 // pred_region
      %57 = dma.done [#allocation3], 128
    $region25: #{tpu_custom_call.1} parent=1 // pred_fallthru
      _
    // Predicated region
    $region26: #{tpu_custom_call.1} parent=1 // pred_check
      _
    $region27: #{tpu_custom_call.1} parent=1 // pred_check_branch
      %59 = sbr.rel (0) target = $region29
    $region28: #{tpu_custom_call.1} parent=1 // pred_region
      %61 = dma.done [#allocation6], 256
    $region29: #{tpu_custom_call.1} parent=1 // pred_fallthru
      _
    // Predicated region
    $region30: #{tpu_custom_call.1} parent=1 // pred_check
      _
    $region31: #{tpu_custom_call.1} parent=1 // pred_check_branch
      %63 = sbr.rel (0) target = $region33
    $region32: #{tpu_custom_call.1} parent=1 // pred_region
      %65 = dma.done [#allocation6], 1024
    $region33: #{tpu_custom_call.1} parent=1 // pred_fallthru
      _
    %v67 = vld [vmem:[#allocation2] sm:$0xff]
    %v68 = vpack.c.bf16 %v67, %v67
    %v69 = vld [vmem:[#allocation5] sm:$0xf]
    %v70 = vld [vmem:[#allocation5 + $0x4] sm:$0xf]
    %v71 = vld [vmem:[#allocation5 + $0x8] sm:$0xf]
    %v72 = vld [vmem:[#allocation5 + $0xc] sm:$0xf]
    %v73 = vld [vmem:[%s2] sm:$0x1]
    %v75 = vperm.slane %v73, 0
    %v81 = vunpack.c.l.b16 %v69
    %v82 = vunpack.c.l.b16 %v70
    %v83 = vunpack.c.l.b16 %v71
    %v84 = vunpack.c.l.b16 %v72
    %v85 = vpack.c.b16 %v82, %v81
    %v86 = vpack.c.b16 %v84, %v83
    %vm89 = vcmask 261120
    %v91 = vsel %vm89, %v68, 0
    %93 = vmatpush.bf16.msra.mxu0 0
    %94 = vmatpush.bf16.msra.mxu0 0
    %95 = vmatpush.bf16.msra.mxu0 0
    %96 = vmatpush.bf16.msra.mxu0 0
    %97 = vmatpush.bf16.msra.mxu0 0
    %98 = vmatpush.bf16.msra.mxu0 0
    %99 = vmatpush.bf16.msra.mxu0 %v86
    %100 = vmatpush.bf16.msra.mxu0 %v85
    %101 = vmatmul.bf16.gmra.mxu0 %v91
    %v102 = vpop.f32.mrf.mxu0
    %v103 = vadd.f32 %v75, %v102
    %v104 = vpop.f32.mrf.mxu0
    %105 = vdwg.mxu0
    %v106 = vmul.f32 %v103, 0.5
    %v107 = vmul.f32 %v103, 0.70710677
    %v108 = vmul.f32 %v107, %v107
    %v109 = vmin.f32 16.0, %v108
    %v110 = vmul.f32 %v109, 2.1237322e-06
    %v111 = vadd.f32 %v110, 0.00028619796
    %v112 = vmul.f32 %v109, %v111
    %v113 = vadd.f32 %v112, 0.0036580483
    %v114 = vmul.f32 %v109, %v113
    %v115 = vadd.f32 %v114, 0.05243302
    %v116 = vmul.f32 %v109, %v115
    %v117 = vadd.f32 %v116, 0.18741608
    %v118 = vmul.f32 %v109, %v117
    %v119 = vadd.f32 %v118, 1.1283791
    %v120 = vmul.f32 %v107, %v119
    %v121 = vmul.f32 %v109, 3.8918573e-05
    %v122 = vadd.f32 %v121, 0.001143296
    %v123 = vmul.f32 %v109, %v122
    %v124 = vadd.f32 %v123, 0.014752088
    %v125 = vmul.f32 %v109, %v124
    %v126 = vadd.f32 %v125, 0.112945676
    %v127 = vmul.f32 %v109, %v126
    %v128 = vadd.f32 %v127, 0.4994258
    %v129 = vmul.f32 %v109, %v128
    %v130 = vadd.f32 %v129, 1.0
    %v131 = vrcp.pop %v130
    %v132 = vmul.f32 %v130, %v131
    %v133 = vsub.f32 1.0, %v132
    %v134 = vmul.f32 %v131, %v133
    %v135 = vadd.f32 %v131, %v134
    %vm136 = vweird.f32 %v130
    %vm137 = vweird.f32 %v131
    %vm138 = vmor %vm136, %vm137
    %v139 = vsel %vm138, %v131, %v135
    %v140 = vand.u32 2147483647, %v130
    %vm141 = vcmp.eq.f32.partialorder %v140, 8.507059e+37
    %v142 = vand.u32 %v130, 2147483648
    %v143 = vor.u32 1.1754944e-38, %v142
    %v144 = vsel %vm141, %v143, %v139
    %v145 = vmul.f32 %v120, %v144
    %v146 = vmin.f32 %v145, 1.0
    %v147 = vmax.f32 %v146, -1.0
    %v148 = vadd.f32 %v147, 1.0
    %v149 = vmul.f32 %v106, %v148
    %150 = vadd.xlane.f32.xlu0 %v149
    %v151 = vpop.xlane.xlu0 %150
    %v152 = vmul.f32 %v149, %v149
    %153 = vadd.xlane.f32.xlu0 %v152
    %v154 = vpop.xlane.xlu0 %153
    %v155 = vmul.f32 %v151, 0.015625
    %v156 = vmul.f32 %v154, 0.015625
    %v157 = vmul.f32 %v155, %v155
    %v158 = vsub.f32 %v156, %v157
    %v159 = vsub.f32 %v149, %v155
    %v160 = vadd.f32 %v158, 1e-05
    %v161 = vrsqrt.pop %v160
    %v162 = vmul.f32 %v161, %v160
    %v163 = vmul.f32 %v162, %v161
    %v164 = vmul.f32 0.5, %v163
    %v165 = vsub.f32 1.5, %v164
    %v166 = vmul.f32 %v161, %v165
    %vm167 = vweird.f32 %v160
    %vm168 = vweird.f32 %v161
    %vm169 = vmor %vm167, %vm168
    %v170 = vsel %vm169, %v161, %v166
    %v171 = vmul.f32 %v159, %v170
    %v172 = vpack.c.bf16 %v171, %v171
    %v173 = vld [vmem:[#allocation7] sm:$0xf]
    %v174 = vld [vmem:[#allocation7 + $0x4] sm:$0xf]
    %v175 = vld [vmem:[#allocation7 + $0x8] sm:$0xf]
    %v176 = vld [vmem:[#allocation7 + $0xc] sm:$0xf]
    %v177 = vld [vmem:[#allocation7 + $0x10] sm:$0xf]
    %v178 = vld [vmem:[#allocation7 + $0x14] sm:$0xf]
    %v179 = vld [vmem:[#allocation7 + $0x18] sm:$0xf]
    %v180 = vld [vmem:[#allocation7 + $0x1c] sm:$0xf]
    %v181 = vld [vmem:[#allocation7 + $0x20] sm:$0xf]
    %v182 = vld [vmem:[#allocation7 + $0x24] sm:$0xf]
    %v183 = vld [vmem:[#allocation7 + $0x28] sm:$0xf]
    %v184 = vld [vmem:[#allocation7 + $0x2c] sm:$0xf]
    %v185 = vld [vmem:[#allocation7 + $0x30] sm:$0xf]
    %v186 = vld [vmem:[#allocation7 + $0x34] sm:$0xf]
    %v187 = vld [vmem:[#allocation7 + $0x38] sm:$0xf]
    %v188 = vld [vmem:[#allocation7 + $0x3c] sm:$0xf]
    %v189 = vld [vmem:[%s4] sm:$0x1]
    %v191 = vperm.slane %v189, 0
    %v209 = vunpack.c.l.b16 %v173
    %v210 = vunpack.c.l.b16 %v174
    %v211 = vunpack.c.l.b16 %v175
    %v212 = vunpack.c.l.b16 %v176
    %v213 = vunpack.c.l.b16 %v177
    %v214 = vunpack.c.l.b16 %v178
    %v215 = vunpack.c.l.b16 %v179
    %v216 = vunpack.c.l.b16 %v180
    %v217 = vunpack.c.l.b16 %v181
    %v218 = vunpack.c.l.b16 %v182
    %v219 = vunpack.c.l.b16 %v183
    %v220 = vunpack.c.l.b16 %v184
    %v221 = vunpack.c.l.b16 %v185
    %v222 = vunpack.c.l.b16 %v186
    %v223 = vunpack.c.l.b16 %v187
    %v224 = vunpack.c.l.b16 %v188
    %v225 = vpack.c.b16 %v210, %v209
    %v226 = vpack.c.b16 %v212, %v211
    %v227 = vpack.c.b16 %v214, %v213
    %v228 = vpack.c.b16 %v216, %v215
    %v229 = vpack.c.b16 %v218, %v217
    %v230 = vpack.c.b16 %v220, %v219
    %v231 = vpack.c.b16 %v222, %v221
    %v232 = vpack.c.b16 %v224, %v223
    %241 = vmatpush.bf16.msra.mxu0 %v232
    %242 = vmatpush.bf16.msra.mxu0 %v231
    %243 = vmatpush.bf16.msra.mxu0 %v230
    %244 = vmatpush.bf16.msra.mxu0 %v229
    %245 = vmatpush.bf16.msra.mxu0 %v228
    %246 = vmatpush.bf16.msra.mxu0 %v227
    %247 = vmatpush.bf16.msra.mxu0 %v226
    %248 = vmatpush.bf16.msra.mxu0 %v225
    %249 = vmatmul.bf16.gmra.mxu0 %v172
    %v250 = vpop.f32.mrf.mxu0
    %v251 = vadd.f32 %v191, %v250
    %v252 = vpop.f32.mrf.mxu0
    %253 = vdwg.mxu0
    %254 = vst [vmem:[#allocation8] sm:$0xff] %v251
    // Predicated region
    $region34: #{tpu_custom_call.1} parent=1 // pred_check
      _
    $region35: #{tpu_custom_call.1} parent=1 // pred_check_branch
      %256 = sbr.rel (0) target = $region37
    $region36: #{tpu_custom_call.1} parent=1 // pred_region
      %258 = vsyncadd [#allocation4], 0
      %s260 = sshll.u32 [#allocation8], 4
      %s261 = int_to_ptr.vmem [resolvable:$true] %s260
      %s262 = sshll.u32 %s5, 4
      %s263 = int_to_ptr.hbm [resolvable:$true] %s262
      %265 = dma.vmem_to_hbm [thread:$0]  %s261, 128, %s263, [#allocation4]
    $region37: #{tpu_custom_call.1} parent=1 // pred_fallthru
      _
    // Predicated region
    $region38: #{tpu_custom_call.1} parent=1 // pred_check
      _
    $region39: #{tpu_custom_call.1} parent=1 // pred_check_branch
      %267 = sbr.rel (0) target = $region41
    $region40: #{tpu_custom_call.1} parent=1 // pred_region
      %269 = dma.done [#allocation4], 128
    $region41: #{tpu_custom_call.1} parent=1 // pred_fallthru
      _
    %270 = vsyncpa [#allocation3], 1
    %271 = vsyncpa [#allocation6], 1
    %272 = vsyncpa [#allocation4], 1

// kernel: tpu_custom_call.1
$region0: #{tpu_custom_call.1}
  #allocation0 [shape = 'u32[]', space=smem, size = 0x4, offset = 0x4, fixed_abs, tag = 'smem constant byte address 0x4 - core index']
  #allocation1 [shape = 'u32[72,128]{1,0:T(1,128)}', space=vmem, size = 0x9000, scoped, tag = 'internal scratch']
  %s0 = inlined_call_operand.hbm [shape: f32[8,32], index: 0, kind: input, shape index: {}]
  %s1 = inlined_call_operand.hbm [shape: bf16[32,128], index: 1, kind: input, shape index: {}]
  %s2 = inlined_call_operand.vmem [shape: f32[1,128], index: 2, kind: input, shape index: {}]
  %s3 = inlined_call_operand.hbm [shape: bf16[128,128], index: 3, kind: input, shape index: {}]
  %s4 = inlined_call_operand.vmem [shape: f32[1,128], index: 4, kind: input, shape index: {}]
  %s5 = inlined_call_operand.hbm [shape: f32[8,128], index: 5, kind: output, shape index: {}]
  %s6 = sld [smem:[#allocation0]]
  $region42: #{tpu_custom_call.1} parent=0
    _
  %s8 = ssub.s32 1, %s6
  %s9 = scalar_select 0, %s8, %s6
  $region1: #{tpu_custom_call.1} parent=0
    #allocation2 [shape = 'u8[4096]{0}', space=vmem, size = 0x1000, scoped, tag = 'input window, operand 0, single buffered']
    #allocation3 [shape = 's32[1]{0}', space=sflag, size = 0x4, scoped, tag = 'scoped memory for tpu_custom_call.1']
    #allocation4 [shape = 's32[1]{0}', space=sflag, size = 0x4, scoped, tag = 'scoped memory for tpu_custom_call.1']
    #allocation5 [shape = 'u8[8192]{0}', space=vmem, size = 0x2000, scoped, tag = 'input window, operand 1, single buffered']
    #allocation6 [shape = 's32[1]{0}', space=sflag, size = 0x4, scoped, tag = 'scoped memory for tpu_custom_call.1']
    #allocation7 [shape = 'u8[32768]{0}', space=vmem, size = 0x8000, scoped, tag = 'input window, operand 3, single buffered']
    #allocation8 [shape = 'u8[4096]{0}', space=vmem, size = 0x1000, scoped, tag = 'output window, operand 0, single buffered']
    %10 = vsyncpa [#allocation3], 0
    %11 = vsyncpa [#allocation6], 0
    %12 = vsyncpa [#allocation4], 0
    // Predicated region
    $region2: #{tpu_custom_call.1} parent=1 // pred_check
      _
    $region3: #{tpu_custom_call.1} parent=1 // pred_check_branch
      %14 = sbr.rel (0) target = $region5
    $region4: #{tpu_custom_call.1} parent=1 // pred_region
      %16 = vsyncadd [#allocation3], 0
      %s18 = sshll.u32 %s0, 4
      %s19 = int_to_ptr.hbm [resolvable:$true] %s18
      %s20 = sshll.u32 [#allocation2], 4
      %s21 = int_to_ptr.vmem [resolvable:$true] %s20
      %23 = dma.hbm_to_vmem [thread:$0]  %s19, 128, %s21, [#allocation3]
    $region5: #{tpu_custom_call.1} parent=1 // pred_fallthru
      _
    // Predicated region
    $region6: #{tpu_custom_call.1} parent=1 // pred_check
      _
    $region7: #{tpu_custom_call.1} parent=1 // pred_check_branch
      %25 = sbr.rel (0) target = $region9
    $region8: #{tpu_custom_call.1} parent=1 // pred_region
      %27 = vsyncadd [#allocation6], 0
      %s28 = sshll.u32 %s1, 4
      %s29 = int_to_ptr.hbm [resolvable:$true] %s28
      %s30 = sshll.u32 [#allocation5], 4
      %s31 = int_to_ptr.vmem [resolvable:$true] %s30
      %36 = dma.hbm_to_vmem [thread:$0]  %s29, 256, %s31, [#allocation6], 64, 64, 4
    $region9: #{tpu_custom_call.1} parent=1 // pred_fallthru
      _
    // Predicated region
    $region10: #{tpu_custom_call.1} parent=1 // pred_check
      _
    $region11: #{tpu_custom_call.1} parent=1 // pred_check_branch
      %38 = sbr.rel (0) target = $region13
    $region12: #{tpu_custom_call.1} parent=1 // pred_region
      _
    $region13: #{tpu_custom_call.1} parent=1 // pred_fallthru
      _
    // Predicated region
    $region14: #{tpu_custom_call.1} parent=1 // pred_check
      _
    $region15: #{tpu_custom_call.1} parent=1 // pred_check_branch
      %40 = sbr.rel (0) target = $region17
    $region16: #{tpu_custom_call.1} parent=1 // pred_region
      %42 = vsyncadd [#allocation6], 0
      %s43 = sshll.u32 %s3, 4
      %s44 = int_to_ptr.hbm [resolvable:$true] %s43
      %s45 = sshll.u32 [#allocation7], 4
      %s46 = int_to_ptr.vmem [resolvable:$true] %s45
      %51 = dma.hbm_to_vmem [thread:$0]  %s44, 1024, %s46, [#allocation6], 64, 64, 4
    $region17: #{tpu_custom_call.1} parent=1 // pred_fallthru
      _
    // Predicated region
    $region18: #{tpu_custom_call.1} parent=1 // pred_check
      _
    $region19: #{tpu_custom_call.1} parent=1 // pred_check_branch
      %53 = sbr.rel (0) target = $region21
    $region20: #{tpu_custom_call.1} parent=1 // pred_region
      _
    $region21: #{tpu_custom_call.1} parent=1 // pred_fallthru
      _
    // Predicated region
    $region22: #{tpu_custom_call.1} parent=1 // pred_check
      _
    $region23: #{tpu_custom_call.1} parent=1 // pred_check_branch
      %55 = sbr.rel (0) target = $region25
    $region24: #{tpu_custom_call.1} parent=1 // pred_region
      %57 = dma.done [#allocation3], 128
    $region25: #{tpu_custom_call.1} parent=1 // pred_fallthru
      _
    // Predicated region
    $region26: #{tpu_custom_call.1} parent=1 // pred_check
      _
    $region27: #{tpu_custom_call.1} parent=1 // pred_check_branch
      %59 = sbr.rel (0) target = $region29
    $region28: #{tpu_custom_call.1} parent=1 // pred_region
      %61 = dma.done [#allocation6], 256
    $region29: #{tpu_custom_call.1} parent=1 // pred_fallthru
      _
    // Predicated region
    $region30: #{tpu_custom_call.1} parent=1 // pred_check
      _
    $region31: #{tpu_custom_call.1} parent=1 // pred_check_branch
      %63 = sbr.rel (0) target = $region33
    $region32: #{tpu_custom_call.1} parent=1 // pred_region
      %65 = dma.done [#allocation6], 1024
    $region33: #{tpu_custom_call.1} parent=1 // pred_fallthru
      _
    %v67 = vld [vmem:[#allocation2] sm:$0xff]
    %v68 = vpack.c.bf16 %v67, %v67
    %v69 = vld [vmem:[#allocation5] sm:$0xf]
    %v70 = vld [vmem:[#allocation5 + $0x4] sm:$0xf]
    %v71 = vld [vmem:[#allocation5 + $0x8] sm:$0xf]
    %v72 = vld [vmem:[#allocation5 + $0xc] sm:$0xf]
    %v73 = vld [vmem:[%s2] sm:$0x1]
    %v75 = vperm.slane %v73, 0
    %v81 = vunpack.c.l.b16 %v69
    %v82 = vunpack.c.l.b16 %v70
    %v83 = vunpack.c.l.b16 %v71
    %v84 = vunpack.c.l.b16 %v72
    %v85 = vpack.c.b16 %v82, %v81
    %v86 = vpack.c.b16 %v84, %v83
    %vm89 = vcmask 261120
    %v91 = vsel %vm89, %v68, 0
    %93 = vmatpush.bf16.msra.mxu0 0
    %94 = vmatpush.bf16.msra.mxu0 0
    %95 = vmatpush.bf16.msra.mxu0 0
    %96 = vmatpush.bf16.msra.mxu0 0
    %97 = vmatpush.bf16.msra.mxu0 0
    %98 = vmatpush.bf16.msra.mxu0 0
    %99 = vmatpush.bf16.msra.mxu0 %v86
    %100 = vmatpush.bf16.msra.mxu0 %v85
    %101 = vmatmul.bf16.gmra.mxu0 %v91
    %v102 = vpop.f32.mrf.mxu0
    %v103 = vadd.f32 %v75, %v102
    %v104 = vpop.f32.mrf.mxu0
    %105 = vdwg.mxu0
    %v106 = vmul.f32 %v103, 0.5
    %v107 = vmul.f32 %v103, 0.70710677
    %v108 = vmul.f32 %v107, %v107
    %v109 = vmin.f32 16.0, %v108
    %v110 = vmul.f32 %v109, 2.1237322e-06
    %v111 = vadd.f32 %v110, 0.00028619796
    %v112 = vmul.f32 %v109, %v111
    %v113 = vadd.f32 %v112, 0.0036580483
    %v114 = vmul.f32 %v109, %v113
    %v115 = vadd.f32 %v114, 0.05243302
    %v116 = vmul.f32 %v109, %v115
    %v117 = vadd.f32 %v116, 0.18741608
    %v118 = vmul.f32 %v109, %v117
    %v119 = vadd.f32 %v118, 1.1283791
    %v120 = vmul.f32 %v107, %v119
    %v121 = vmul.f32 %v109, 3.8918573e-05
    %v122 = vadd.f32 %v121, 0.001143296
    %v123 = vmul.f32 %v109, %v122
    %v124 = vadd.f32 %v123, 0.014752088
    %v125 = vmul.f32 %v109, %v124
    %v126 = vadd.f32 %v125, 0.112945676
    %v127 = vmul.f32 %v109, %v126
    %v128 = vadd.f32 %v127, 0.4994258
    %v129 = vmul.f32 %v109, %v128
    %v130 = vadd.f32 %v129, 1.0
    %v131 = vrcp.pop %v130
    %v132 = vmul.f32 %v130, %v131
    %v133 = vsub.f32 1.0, %v132
    %v134 = vmul.f32 %v131, %v133
    %v135 = vadd.f32 %v131, %v134
    %vm136 = vweird.f32 %v130
    %vm137 = vweird.f32 %v131
    %vm138 = vmor %vm136, %vm137
    %v139 = vsel %vm138, %v131, %v135
    %v140 = vand.u32 2147483647, %v130
    %vm141 = vcmp.eq.f32.partialorder %v140, 8.507059e+37
    %v142 = vand.u32 %v130, 2147483648
    %v143 = vor.u32 1.1754944e-38, %v142
    %v144 = vsel %vm141, %v143, %v139
    %v145 = vmul.f32 %v120, %v144
    %v146 = vmin.f32 %v145, 1.0
    %v147 = vmax.f32 %v146, -1.0
    %v148 = vadd.f32 %v147, 1.0
    %v149 = vmul.f32 %v106, %v148
    %150 = vadd.xlane.f32.xlu0 %v149
    %v151 = vpop.xlane.xlu0 %150
    %v152 = vmul.f32 %v149, %v149
    %153 = vadd.xlane.f32.xlu0 %v152
    %v154 = vpop.xlane.xlu0 %153
    %v155 = vmul.f32 %v151, 0.015625
    %v156 = vmul.f32 %v154, 0.015625
    %v157 = vmul.f32 %v155, %v155
    %v158 = vsub.f32 %v156, %v157
    %v159 = vsub.f32 %v149, %v155
    %v160 = vadd.f32 %v158, 1e-05
    %v161 = vrsqrt.pop %v160
    %v162 = vmul.f32 %v161, %v160
    %v163 = vmul.f32 %v162, %v161
    %v164 = vmul.f32 0.5, %v163
    %v165 = vsub.f32 1.5, %v164
    %v166 = vmul.f32 %v161, %v165
    %vm167 = vweird.f32 %v160
    %vm168 = vweird.f32 %v161
    %vm169 = vmor %vm167, %vm168
    %v170 = vsel %vm169, %v161, %v166
    %v171 = vmul.f32 %v159, %v170
    %v172 = vpack.c.bf16 %v171, %v171
    %v173 = vld [vmem:[#allocation7] sm:$0xf]
    %v174 = vld [vmem:[#allocation7 + $0x4] sm:$0xf]
    %v175 = vld [vmem:[#allocation7 + $0x8] sm:$0xf]
    %v176 = vld [vmem:[#allocation7 + $0xc] sm:$0xf]
    %v177 = vld [vmem:[#allocation7 + $0x10] sm:$0xf]
    %v178 = vld [vmem:[#allocation7 + $0x14] sm:$0xf]
    %v179 = vld [vmem:[#allocation7 + $0x18] sm:$0xf]
    %v180 = vld [vmem:[#allocation7 + $0x1c] sm:$0xf]
    %v181 = vld [vmem:[#allocation7 + $0x20] sm:$0xf]
    %v182 = vld [vmem:[#allocation7 + $0x24] sm:$0xf]
    %v183 = vld [vmem:[#allocation7 + $0x28] sm:$0xf]
    %v184 = vld [vmem:[#allocation7 + $0x2c] sm:$0xf]
    %v185 = vld [vmem:[#allocation7 + $0x30] sm:$0xf]
    %v186 = vld [vmem:[#allocation7 + $0x34] sm:$0xf]
    %v187 = vld [vmem:[#allocation7 + $0x38] sm:$0xf]
    %v188 = vld [vmem:[#allocation7 + $0x3c] sm:$0xf]
    %v189 = vld [vmem:[%s4] sm:$0x1]
    %v191 = vperm.slane %v189, 0
    %v209 = vunpack.c.l.b16 %v173
    %v210 = vunpack.c.l.b16 %v174
    %v211 = vunpack.c.l.b16 %v175
    %v212 = vunpack.c.l.b16 %v176
    %v213 = vunpack.c.l.b16 %v177
    %v214 = vunpack.c.l.b16 %v178
    %v215 = vunpack.c.l.b16 %v179
    %v216 = vunpack.c.l.b16 %v180
    %v217 = vunpack.c.l.b16 %v181
    %v218 = vunpack.c.l.b16 %v182
    %v219 = vunpack.c.l.b16 %v183
    %v220 = vunpack.c.l.b16 %v184
    %v221 = vunpack.c.l.b16 %v185
    %v222 = vunpack.c.l.b16 %v186
    %v223 = vunpack.c.l.b16 %v187
    %v224 = vunpack.c.l.b16 %v188
    %v225 = vpack.c.b16 %v210, %v209
    %v226 = vpack.c.b16 %v212, %v211
    %v227 = vpack.c.b16 %v214, %v213
    %v228 = vpack.c.b16 %v216, %v215
    %v229 = vpack.c.b16 %v218, %v217
    %v230 = vpack.c.b16 %v220, %v219
    %v231 = vpack.c.b16 %v222, %v221
    %v232 = vpack.c.b16 %v224, %v223
    %241 = vmatpush.bf16.msra.mxu0 %v232
    %242 = vmatpush.bf16.msra.mxu0 %v231
    %243 = vmatpush.bf16.msra.mxu0 %v230
    %244 = vmatpush.bf16.msra.mxu0 %v229
    %245 = vmatpush.bf16.msra.mxu0 %v228
    %246 = vmatpush.bf16.msra.mxu0 %v227
    %247 = vmatpush.bf16.msra.mxu0 %v226
    %248 = vmatpush.bf16.msra.mxu0 %v225
    %249 = vmatmul.bf16.gmra.mxu0 %v172
    %v250 = vpop.f32.mrf.mxu0
    %v251 = vadd.f32 %v191, %v250
    %v252 = vpop.f32.mrf.mxu0
    %253 = vdwg.mxu0
    %254 = vst [vmem:[#allocation8] sm:$0xff] %v251
    // Predicated region
    $region34: #{tpu_custom_call.1} parent=1 // pred_check
      _
    $region35: #{tpu_custom_call.1} parent=1 // pred_check_branch
      %256 = sbr.rel (0) target = $region37
    $region36: #{tpu_custom_call.1} parent=1 // pred_region
      %258 = vsyncadd [#allocation4], 0
      %s260 = sshll.u32 [#allocation8], 4
      %s261 = int_to_ptr.vmem [resolvable:$true] %s260
      %s262 = sshll.u32 %s5, 4
      %s263 = int_to_ptr.hbm [resolvable:$true] %s262
      %265 = dma.vmem_to_hbm [thread:$0]  %s261, 128, %s263, [#allocation4]
    $region37: #{tpu_custom_call.1} parent=1 // pred_fallthru
      _
    // Predicated region
    $region38: #{tpu_custom_call.1} parent=1 // pred_check
      _
    $region39: #{tpu_custom_call.1} parent=1 // pred_check_branch
      %267 = sbr.rel (0) target = $region41
    $region40: #{tpu_custom_call.1} parent=1 // pred_region
      %269 = dma.done [#allocation4], 128
    $region41: #{tpu_custom_call.1} parent=1 // pred_fallthru
      _
    %270 = vsyncpa [#allocation3], 1
    %271 = vsyncpa [#allocation6], 1
    %272 = vsyncpa [#allocation4], 1

</llo_original>
